<compile_context>
chip_gen: v7x
topology: tpu7x:2x2x1
jax: 0.10.0
libtpu: 0.0.40
codegen_flags: <defaults>
</compile_context>

<pallas_src>
import functools

import jax
import jax.numpy as jnp
from jax.experimental import pallas as pl
from jax.experimental.pallas import tpu as pltpu

args = {"alpha": 0.2}


def _vmem_capacity_bytes():
    try:
        info = pltpu.get_tpu_info()
        return int(getattr(info, "vmem_capacity_bytes", 128 << 20))
    except Exception:
        return 128 << 20


def _choose_tiling(R, C, max_tile_r, budget_bytes):
    """Row-tile and inner-chunk sizes for the streaming reduction."""
    # Streams per row: target(4B) + preds(4B) + ct(1B) + cn(1B), double-buffered.
    bytes_per_row = 2 * (4 + 4 + 1 + 1) * C
    tile_r = max(32, budget_bytes // bytes_per_row)
    tile_r = min(tile_r, max_tile_r)
    # Never (much) exceed the array, and keep >= 2 grid steps when R allows so
    # the "parallel" axis can feed both TensorCores on v7x (and megacore).
    target_rows = pl.cdiv(R, 2) if R > 32 else R
    tile_r = min(tile_r, 32 * pl.cdiv(target_rows, 32))
    tile_r = max(32, (tile_r // 32) * 32)        # int8-friendly sublane count
    chunk = min(256, tile_r)                     # rows per inner fori_loop step
    tile_r = max(chunk, (tile_r // chunk) * chunk)
    return tile_r, chunk


def _weighted_sq_err_partial_kernel(t_ref, p_ref, ct_ref, cn_ref, o_ref, *,
                                    rows_total, tile_r, chunk, alpha):
    """Per-tile partial of sum(((1-a)*ct + a*cn) * (P - T)^2) as an (8, C) slab."""
    i = pl.program_id(0)
    C = o_ref.shape[-1]
    n_chunks = tile_r // chunk
    base = i * tile_r
    sub = jax.lax.broadcasted_iota(jnp.int32, (chunk, 1), 0)

    def body(s, acc):
        off = pl.multiple_of(s * chunk, chunk)
        sl = pl.ds(off, chunk)
        t = t_ref[sl, :].astype(jnp.float32)
        p = p_ref[sl, :].astype(jnp.float32)
        d = p - t
        w = ((1.0 - alpha) * ct_ref[sl, :].astype(jnp.float32)
             + alpha * cn_ref[sl, :].astype(jnp.float32))
        x = w * d * d                                    # (chunk, C) f32
        # Mask rows past the logical extent (only the boundary tile has any
        # effect; the select also kills NaN/Inf in unspecified OOB padding).
        row = base + off + sub                           # (chunk, 1)
        x = jnp.where(row < rows_total, x, 0.0)
        # Fold the chunk into an (8, C) slab: splitting the leading dim keeps
        # (8,128) tiling intact -> pure VPU vreg adds hidden under the DMA.
        return acc + jnp.sum(x.reshape(chunk // 8, 8, C), axis=0)

    acc0 = jnp.zeros((8, C), jnp.float32)
    o_ref[...] = jax.lax.fori_loop(0, n_chunks, body, acc0,
                                   unroll=True if n_chunks <= 8 else False)


def weighted_sq_err_sum(target, preds, ct, cn, alpha, *, max_tile_r=8192):
    """sum(((1-a)*ct + a*cn) * (preds - target)**2) via a row-tiled Pallas kernel."""
    R, C = target.shape
    vmem_cap = _vmem_capacity_bytes()
    budget = min(24 << 20, vmem_cap // 5)        # ~24 MiB v5e/v6e, ~12.8 MiB v7x
    tile_r, chunk = _choose_tiling(R, C, max_tile_r, budget)
    num_tiles = pl.cdiv(R, tile_r)

    spec = pl.BlockSpec((tile_r, C), lambda i: (i, 0))
    kernel = functools.partial(_weighted_sq_err_partial_kernel,
                               rows_total=R, tile_r=tile_r, chunk=chunk,
                               alpha=float(alpha))

    cost = pl.CostEstimate(
        flops=8 * R * C,
        transcendentals=0,
        bytes_accessed=R * C * (4 + 4 + 1 + 1) + num_tiles * 8 * C * 4)
    vmem_limit = int(max(16 << 20, min(vmem_cap // 2, budget + (8 << 20))))

    partials = pl.pallas_call(
        kernel,
        out_shape=jax.ShapeDtypeStruct((num_tiles, 8, C), jnp.float32),
        grid=(num_tiles,),
        in_specs=[spec, spec, spec, spec],
        out_specs=pl.BlockSpec((None, 8, C), lambda i: (i, 0, 0)),
        compiler_params=pltpu.CompilerParams(
            dimension_semantics=("parallel",),
            vmem_limit_bytes=vmem_limit),
        cost_estimate=cost,
    )(target, preds, ct, cn)

    return jnp.sum(partials)


def my_loss(true_index, neg_index, target, preds, alpha=args["alpha"]):
    """JAX/Pallas equivalent of MyLoss.forward.

    true_index: int array [Nt, 2] of (row, col) pairs
    neg_index:  int array [Nn, 2] of (row, col) pairs
    target, preds: float arrays [R, C] (any float dtype; cast in-kernel)
    """
    R, C = target.shape
    true_index = true_index.astype(jnp.int32)
    neg_index = neg_index.astype(jnp.int32)
    # Compressed weight stream: one int8 duplicate-count plane per index set
    # (1 B/elem each vs. 4 B/elem dense f32 W).  Exact: counts are integers and
    # the alpha expansion happens in f32 inside the kernel, so duplicate pairs
    # accumulate exactly like PyTorch advanced indexing + .sum().
    # NOTE: assumes < 128 duplicates of the same (row, col) pair per index set.
    ct = jnp.zeros((R, C), jnp.int8).at[
        true_index[:, 0], true_index[:, 1]].add(
            jnp.ones((true_index.shape[0],), jnp.int8))
    cn = jnp.zeros((R, C), jnp.int8).at[
        neg_index[:, 0], neg_index[:, 1]].add(
            jnp.ones((neg_index.shape[0],), jnp.int8))
    # TODO(synk): for extremely sparse index sets a scalar-prefetch kernel that
    # only touches tiles containing indices (or a pure-JAX gather) would avoid
    # streaming the full matrices; dense streaming is kept for generality.
    return weighted_sq_err_sum(target, preds, ct, cn, alpha)


def _reference_loss(true_index, neg_index, target, preds, alpha=args["alpha"]):
    loss_sum = (preds.astype(jnp.float32) - target.astype(jnp.float32)) ** 2
    t = loss_sum[true_index[:, 0], true_index[:, 1]].sum()
    n = loss_sum[neg_index[:, 0], neg_index[:, 1]].sum()
    return (1.0 - alpha) * t + alpha * n


if __name__ == "__main__":
    key = jax.random.PRNGKey(0)
    loss_fn = jax.jit(my_loss)

    def run_case(case_key, R, C, Nt, Nn):
        k1, k2, k3, k4, k5, k6 = jax.random.split(case_key, 6)
        target = (jax.random.uniform(k1, (R, C), jnp.float32) > 0.9
                  ).astype(jnp.float32)
        preds = jax.random.normal(k2, (R, C), jnp.float32)
        true_index = jnp.stack(
            [jax.random.randint(k3, (Nt,), 0, R),
             jax.random.randint(k4, (Nt,), 0, C)], axis=1).astype(jnp.int32)
        neg_index = jnp.stack(
            [jax.random.randint(k5, (Nn,), 0, R),
             jax.random.randint(k6, (Nn,), 0, C)], axis=1).astype(jnp.int32)

        out = jax.block_until_ready(
            loss_fn(true_index, neg_index, target, preds))
        ref = _reference_loss(true_index, neg_index, target, preds)
        assert jnp.allclose(out, ref, rtol=1e-4, atol=1e-4), (out, ref)

    k_a, k_b, k_c = jax.random.split(key, 3)
    run_case(k_a, 64, 128, 20, 30)      # aligned, 2 parallel tiles
    run_case(k_b, 60, 128, 16, 24)      # ragged rows -> boundary masking
    run_case(k_c, 1024, 128, 200, 300)  # multi-chunk in-tile fori_loop path

    print("KERNEL_OK")
</pallas_src>

<mosaic_0001>
module attributes {stable_mosaic.version = 11 : i64} {
  func.func @_weighted_sq_err_partial_kernel(%arg0: i32, %arg1: memref<32x128xf32, #tpu.memory_space<vmem>>, %arg2: memref<32x128xf32, #tpu.memory_space<vmem>>, %arg3: memref<32x128xi8, #tpu.memory_space<vmem>>, %arg4: memref<32x128xi8, #tpu.memory_space<vmem>>, %arg5: memref<1x8x128xf32, #tpu.memory_space<vmem>>) attributes {dimension_semantics = [#tpu.dimension_semantics<parallel>], iteration_bounds = array<i64: 2>, scalar_prefetch = 0 : i64, scratch_operands = 0 : i64, tpu.core_type = #tpu.core_type<tc>, window_params = [{transform_indices = @transform_0, window_bounds = array<i64: 32, 128>}, {transform_indices = @transform_1, window_bounds = array<i64: 32, 128>}, {transform_indices = @transform_2, window_bounds = array<i64: 32, 128>}, {transform_indices = @transform_3, window_bounds = array<i64: 32, 128>}, {transform_indices = @transform_4, window_bounds = array<i64: 1, 8, 128>}]} {
    %c32_i32 = arith.constant 32 : i32
    %0 = arith.muli %arg0, %c32_i32 : i32
    %1 = tpu.iota {dimensions = array<i32: 0>} : vector<32x1xi32>
    %cst = arith.constant 0.000000e+00 : f32
    %2 = vector.broadcast %cst : f32 to vector<8x128xf32>
    %c0_i32 = arith.constant 0 : i32
    %c32_i32_0 = arith.constant 32 : i32
    %3 = arith.muli %c0_i32, %c32_i32_0 : i32
    %4 = tpu.assume_multiple %3, 32 : i32
    %5 = arith.index_cast %4 : i32 to index
    %c0 = arith.constant 0 : index
    %6 = vector.load %arg1[%5, %c0] : memref<32x128xf32, #tpu.memory_space<vmem>>, vector<32x128xf32>
    %7 = arith.index_cast %4 : i32 to index
    %c0_1 = arith.constant 0 : index
    %8 = vector.load %arg2[%7, %c0_1] : memref<32x128xf32, #tpu.memory_space<vmem>>, vector<32x128xf32>
    %9 = arith.subf %8, %6 : vector<32x128xf32>
    %10 = arith.index_cast %4 : i32 to index
    %c0_2 = arith.constant 0 : index
    %11 = vector.load %arg3[%10, %c0_2] : memref<32x128xi8, #tpu.memory_space<vmem>>, vector<32x128xi8>
    %12 = arith.sitofp %11 : vector<32x128xi8> to vector<32x128xf32>
    %cst_3 = arith.constant 8.000000e-01 : f32
    %13 = vector.broadcast %cst_3 : f32 to vector<32x128xf32>
    %14 = arith.mulf %13, %12 : vector<32x128xf32>
    %15 = arith.index_cast %4 : i32 to index
    %c0_4 = arith.constant 0 : index
    %16 = vector.load %arg4[%15, %c0_4] : memref<32x128xi8, #tpu.memory_space<vmem>>, vector<32x128xi8>
    %17 = arith.sitofp %16 : vector<32x128xi8> to vector<32x128xf32>
    %cst_5 = arith.constant 2.000000e-01 : f32
    %18 = vector.broadcast %cst_5 : f32 to vector<32x128xf32>
    %19 = arith.mulf %18, %17 : vector<32x128xf32>
    %20 = arith.addf %14, %19 : vector<32x128xf32>
    %21 = arith.mulf %20, %9 : vector<32x128xf32>
    %22 = arith.mulf %21, %9 : vector<32x128xf32>
    %23 = arith.addi %0, %4 : i32
    %24 = vector.broadcast %23 : i32 to vector<32x1xi32>
    %25 = arith.addi %24, %1 : vector<32x1xi32>
    %c64_i32 = arith.constant 64 : i32
    %26 = vector.broadcast %c64_i32 : i32 to vector<32x1xi32>
    %27 = arith.cmpi slt, %25, %26 : vector<32x1xi32>
    %cst_6 = arith.constant 0.000000e+00 : f32
    %28 = vector.shape_cast %27 : vector<32x1xi1> to vector<32x1xi1>
    %29 = vector.broadcast %28 : vector<32x1xi1> to vector<32x128xi1>
    %30 = vector.broadcast %cst_6 : f32 to vector<32x128xf32>
    %31 = arith.select %29, %22, %30 : vector<32x128xi1>, vector<32x128xf32>
    %32 = vector.shape_cast %31 : vector<32x128xf32> to vector<4x8x128xf32>
    %cst_7 = arith.constant dense<0.000000e+00> : vector<8x128xf32>
    %33 = vector.multi_reduction <add>, %32, %cst_7 [0] : vector<4x8x128xf32> to vector<8x128xf32>
    %34 = arith.addf %2, %33 : vector<8x128xf32>
    %c1_i32 = arith.constant 1 : i32
    %c0_8 = arith.constant 0 : index
    %c0_9 = arith.constant 0 : index
    %c0_10 = arith.constant 0 : index
    %35 = vector.load %arg5[%c0_8, %c0_9, %c0_10] : memref<1x8x128xf32, #tpu.memory_space<vmem>>, vector<1x8x128xf32>
    %36 = vector.shape_cast %35 : vector<1x8x128xf32> to vector<8x128xf32>
    %37 = vector.shape_cast %34 : vector<8x128xf32> to vector<1x8x128xf32>
    tpu.vector_store %arg5[%c0_8, %c0_9, %c0_10], %37 {strides = array<i32>} : memref<1x8x128xf32, #tpu.memory_space<vmem>>, vector<1x8x128xf32>,
    return
  }
  func.func @transform_0(%arg0: i32) -> (i32, i32) {
    %c0_i32 = arith.constant 0 : i32
    %c0_i32_0 = arith.constant 0 : i32
    return %arg0, %c0_i32 : i32, i32
  }
  func.func @transform_1(%arg0: i32) -> (i32, i32) {
    %c0_i32 = arith.constant 0 : i32
    %c0_i32_0 = arith.constant 0 : i32
    return %arg0, %c0_i32 : i32, i32
  }
  func.func @transform_2(%arg0: i32) -> (i32, i32) {
    %c0_i32 = arith.constant 0 : i32
    %c0_i32_0 = arith.constant 0 : i32
    return %arg0, %c0_i32 : i32, i32
  }
  func.func @transform_3(%arg0: i32) -> (i32, i32) {
    %c0_i32 = arith.constant 0 : i32
    %c0_i32_0 = arith.constant 0 : i32
    return %arg0, %c0_i32 : i32, i32
  }
  func.func @transform_4(%arg0: i32) -> (i32, i32, i32) {
    %c0_i32 = arith.constant 0 : i32
    %c0_i32_0 = arith.constant 0 : i32
    %c0_i32_1 = arith.constant 0 : i32
    return %arg0, %c0_i32, %c0_i32_0 : i32, i32, i32
  }
}

</mosaic_0001>

<llo_original>
// kernel: my_loss.1
$region0: #{my_loss.1}
  #allocation0 [shape = 'u32[]', space=smem, size = 0x4, offset = 0x4, fixed_abs, tag = 'smem constant byte address 0x4 - core index']
  #allocation1 [shape = 'u32[144,128]{1,0:T(1,128)}', space=vmem, size = 0x12000, scoped, tag = 'internal scratch']
  %s0 = inlined_call_operand.vmem [shape: f32[64,128], index: 0, kind: input, shape index: {}]
  %s1 = inlined_call_operand.vmem [shape: f32[64,128], index: 1, kind: input, shape index: {}]
  %s2 = inlined_call_operand.vmem [shape: s8[64,128], index: 2, kind: input, shape index: {}]
  %s3 = inlined_call_operand.vmem [shape: s8[64,128], index: 3, kind: input, shape index: {}]
  %s4 = inlined_call_operand.vmem [shape: f32[2,8,128], index: 4, kind: output, shape index: {}]
  %s5 = sld [smem:[#allocation0]]
  $region49: #{my_loss.1} parent=0
    _
  %s7 = ssub.s32 1, %s5
  %s8 = scalar_select 0, %s7, %s5
  loop: start=0, step=1, limit=4
  $region2: #{my_loss.1} parent=0 // loop_pre_header
    _
  $region3: #{my_loss.1} parent=0 // loop_header
    %s10 = sphi 0, %s14
    %p11 = scmp.ge.s32.totalorder %s10, 4
    %s20 = sphi 0, %s22
    %s23 = sphi 0, %s20
    %s24 = sphi 0, %s23
    %s40 = sphi 0, %s24
    %s46 = sphi 0, %s48
    %s49 = sphi 0, %s46
    %s50 = sphi 0, %s49
    %s66 = sphi 0, %s50
    %s72 = sphi 0, %s74
    %s75 = sphi 0, %s72
    %s76 = sphi 0, %s75
    %s92 = sphi 0, %s76
    %s98 = sphi 0, %s100
    %s101 = sphi 0, %s98
    %s102 = sphi 0, %s101
    %s118 = sphi 0, %s102
    %s124 = sphi 0, %s126
    %s127 = sphi 0, %s124
    %s128 = sphi 0, %s127
    %s144 = sphi 0, %s128
  $region4: #{my_loss.1} parent=0 // loop_header_branch
    %13 = sbr.rel (%p11) target = $region8
  $region5: #{my_loss.1} parent=0 // loop_body
    %s15 = ssub.s32 %s10, 1
    %s16 = ssub.s32 %s10, 2
    %s17 = sadd.s32 %s10, 1
    %s18 = ssub.s32 %s10, %s17
    %p19 = scmp.eq.s32.totalorder %s18, 0
    %s21 = sadd.s32 %s20, 1
    %s22 = scalar_select %p19, %s20, %s21
    %p25 = pneg %p19
    %p26 = scmp.eq.s32.totalorder %s10, 1
    %p27 = por %p25, %p26
    %p28 = scmp.ne.s32.totalorder %s20, %s23
    %p29 = scmp.eq.s32.totalorder %s10, 0
    %p30 = por %p28, %p29
    %p31 = scmp.ne.s32.totalorder %s20, %s23
    %p32 = scmp.eq.s32.totalorder %s15, 1
    %p33 = por %p31, %p32
    %p34 = scmp.ne.s32.totalorder %s23, %s24
    %p35 = scmp.eq.s32.totalorder %s15, 0
    %p36 = por %p34, %p35
    %p37 = scmp.ne.s32.totalorder %s23, %s24
    %p38 = scmp.eq.s32.totalorder %s16, 1
    %p39 = por %p37, %p38
    %p41 = scmp.ne.s32.totalorder %s24, %s40
    %p42 = scmp.eq.s32.totalorder %s16, 0
    %p43 = por %p41, %p42
    %s44 = ssub.s32 %s10, %s17
    %p45 = scmp.eq.s32.totalorder %s44, 0
    %s47 = sadd.s32 %s46, 1
    %s48 = scalar_select %p45, %s46, %s47
    %p51 = pneg %p45
    %p52 = scmp.eq.s32.totalorder %s10, 1
    %p53 = por %p51, %p52
    %p54 = scmp.ne.s32.totalorder %s46, %s49
    %p55 = scmp.eq.s32.totalorder %s10, 0
    %p56 = por %p54, %p55
    %p57 = scmp.ne.s32.totalorder %s46, %s49
    %p58 = scmp.eq.s32.totalorder %s15, 1
    %p59 = por %p57, %p58
    %p60 = scmp.ne.s32.totalorder %s49, %s50
    %p61 = scmp.eq.s32.totalorder %s15, 0
    %p62 = por %p60, %p61
    %p63 = scmp.ne.s32.totalorder %s49, %s50
    %p64 = scmp.eq.s32.totalorder %s16, 1
    %p65 = por %p63, %p64
    %p67 = scmp.ne.s32.totalorder %s50, %s66
    %p68 = scmp.eq.s32.totalorder %s16, 0
    %p69 = por %p67, %p68
    %s70 = ssub.s32 %s10, %s17
    %p71 = scmp.eq.s32.totalorder %s70, 0
    %s73 = sadd.s32 %s72, 1
    %s74 = scalar_select %p71, %s72, %s73
    %p77 = pneg %p71
    %p78 = scmp.eq.s32.totalorder %s10, 1
    %p79 = por %p77, %p78
    %p80 = scmp.ne.s32.totalorder %s72, %s75
    %p81 = scmp.eq.s32.totalorder %s10, 0
    %p82 = por %p80, %p81
    %p83 = scmp.ne.s32.totalorder %s72, %s75
    %p84 = scmp.eq.s32.totalorder %s15, 1
    %p85 = por %p83, %p84
    %p86 = scmp.ne.s32.totalorder %s75, %s76
    %p87 = scmp.eq.s32.totalorder %s15, 0
    %p88 = por %p86, %p87
    %p89 = scmp.ne.s32.totalorder %s75, %s76
    %p90 = scmp.eq.s32.totalorder %s16, 1
    %p91 = por %p89, %p90
    %p93 = scmp.ne.s32.totalorder %s76, %s92
    %p94 = scmp.eq.s32.totalorder %s16, 0
    %p95 = por %p93, %p94
    %s96 = ssub.s32 %s10, %s17
    %p97 = scmp.eq.s32.totalorder %s96, 0
    %s99 = sadd.s32 %s98, 1
    %s100 = scalar_select %p97, %s98, %s99
    %p103 = pneg %p97
    %p104 = scmp.eq.s32.totalorder %s10, 1
    %p105 = por %p103, %p104
    %p106 = scmp.ne.s32.totalorder %s98, %s101
    %p107 = scmp.eq.s32.totalorder %s10, 0
    %p108 = por %p106, %p107
    %p109 = scmp.ne.s32.totalorder %s98, %s101
    %p110 = scmp.eq.s32.totalorder %s15, 1
    %p111 = por %p109, %p110
    %p112 = scmp.ne.s32.totalorder %s101, %s102
    %p113 = scmp.eq.s32.totalorder %s15, 0
    %p114 = por %p112, %p113
    %p115 = scmp.ne.s32.totalorder %s101, %s102
    %p116 = scmp.eq.s32.totalorder %s16, 1
    %p117 = por %p115, %p116
    %p119 = scmp.ne.s32.totalorder %s102, %s118
    %p120 = scmp.eq.s32.totalorder %s16, 0
    %p121 = por %p119, %p120
    %s122 = ssub.s32 %s10, %s17
    %p123 = scmp.eq.s32.totalorder %s122, 0
    %s125 = sadd.s32 %s124, 1
    %s126 = scalar_select %p123, %s124, %s125
    %p129 = pneg %p123
    %p130 = scmp.eq.s32.totalorder %s10, 1
    %p131 = por %p129, %p130
    %p132 = scmp.ne.s32.totalorder %s124, %s127
    %p133 = scmp.eq.s32.totalorder %s10, 0
    %p134 = por %p132, %p133
    %p135 = scmp.ne.s32.totalorder %s124, %s127
    %p136 = scmp.eq.s32.totalorder %s15, 1
    %p137 = por %p135, %p136
    %p138 = scmp.ne.s32.totalorder %s127, %s128
    %p139 = scmp.eq.s32.totalorder %s15, 0
    %p140 = por %p138, %p139
    %p141 = scmp.ne.s32.totalorder %s127, %s128
    %p142 = scmp.eq.s32.totalorder %s16, 1
    %p143 = por %p141, %p142
    %p145 = scmp.ne.s32.totalorder %s128, %s144
    %p146 = scmp.eq.s32.totalorder %s16, 0
    %p147 = por %p145, %p146
    %p148 = scmp.le.s32.totalorder 1, %s10
    %p149 = scmp.lt.s32.totalorder %s10, 3
    %p150 = pnand %p148, %p149
    %p151 = pneg %p150
    // Predicated region
    $region9: #{my_loss.1} parent=5 // pred_check
      _
    $region10: #{my_loss.1} parent=5 // pred_check_branch
      %153 = sbr.rel (%p150) target = $region12
    $region11: #{my_loss.1} parent=5 // pred_region
      %s154 = ssub.s32 %s10, 1
    $region12: #{my_loss.1} parent=5 // pred_fallthru
      _
    %p155 = scmp.lt.s32.totalorder %s10, 2
    // Predicated region
    $region13: #{my_loss.1} parent=5 // pred_check
      %p156 = pneg %p155
    $region14: #{my_loss.1} parent=5 // pred_check_branch
      %158 = sbr.rel (%p156) target = $region16
    $region15: #{my_loss.1} parent=5 // pred_region
      // Predicated region
      $region17: #{my_loss.1} parent=15 // pred_check
        %p159 = pneg %p30
      $region18: #{my_loss.1} parent=15 // pred_check_branch
        %161 = sbr.rel (%p159) target = $region20
      $region19: #{my_loss.1} parent=15 // pred_region
        %s162 = smul.u32 4, %s10
        %p163 = scmp.lt.s32.totalorder %s162, 7
        %s164 = scalar_select %p163, %s162, 7
        %s165 = smul.addr %s164, 8
        %s166 = scalar_lea.vmem %s0, %s165
        %s167 = smul.u32 4, %s10
      $region20: #{my_loss.1} parent=15 // pred_fallthru
        _
      // Predicated region
      $region21: #{my_loss.1} parent=15 // pred_check
        %p168 = pneg %p56
      $region22: #{my_loss.1} parent=15 // pred_check_branch
        %170 = sbr.rel (%p168) target = $region24
      $region23: #{my_loss.1} parent=15 // pred_region
        %s171 = smul.u32 4, %s10
        %p172 = scmp.lt.s32.totalorder %s171, 7
        %s173 = scalar_select %p172, %s171, 7
        %s174 = smul.addr %s173, 8
        %s175 = scalar_lea.vmem %s1, %s174
        %s176 = smul.u32 4, %s10
      $region24: #{my_loss.1} parent=15 // pred_fallthru
        _
      // Predicated region
      $region25: #{my_loss.1} parent=15 // pred_check
        %p177 = pneg %p82
      $region26: #{my_loss.1} parent=15 // pred_check_branch
        %179 = sbr.rel (%p177) target = $region28
      $region27: #{my_loss.1} parent=15 // pred_region
        %s180 = smul.u32 4, %s10
        %p181 = scmp.lt.s32.totalorder %s180, 7
        %s182 = scalar_select %p181, %s180, 7
        %s183 = smul.addr %s182, 2
        %s184 = scalar_lea.vmem %s2, %s183
        %s185 = smul.u32 4, %s10
      $region28: #{my_loss.1} parent=15 // pred_fallthru
        _
      // Predicated region
      $region29: #{my_loss.1} parent=15 // pred_check
        %p186 = pneg %p108
      $region30: #{my_loss.1} parent=15 // pred_check_branch
        %188 = sbr.rel (%p186) target = $region32
      $region31: #{my_loss.1} parent=15 // pred_region
        %s189 = smul.u32 4, %s10
        %p190 = scmp.lt.s32.totalorder %s189, 7
        %s191 = scalar_select %p190, %s189, 7
        %s192 = smul.addr %s191, 2
        %s193 = scalar_lea.vmem %s3, %s192
        %s194 = smul.u32 4, %s10
      $region32: #{my_loss.1} parent=15 // pred_fallthru
        _
    $region16: #{my_loss.1} parent=5 // pred_fallthru
      _
    %p195 = scmp.le.s32.totalorder 1, %s10
    %p196 = scmp.lt.s32.totalorder %s10, 3
    %p197 = pnand %p195, %p196
    %p198 = pneg %p197
    // Predicated region
    $region33: #{my_loss.1} parent=5 // pred_check
      _
    $region34: #{my_loss.1} parent=5 // pred_check_branch
      %200 = sbr.rel (%p197) target = $region36
    $region35: #{my_loss.1} parent=5 // pred_region
      %s201 = ssub.s32 %s10, 1
      %s202 = smul.u32 4, %s15
      %p203 = scmp.lt.s32.totalorder %s202, 7
      %s204 = scalar_select %p203, %s202, 7
      %s205 = smul.addr %s204, 8
      %s206 = scalar_lea.vmem %s0, %s205
      %p207 = pneg %p36
      %p208 = pneg %p33
      %s209 = smul.u32 4, %s15
      %p210 = scmp.lt.s32.totalorder %s209, 7
      %s211 = scalar_select %p210, %s209, 7
      %s212 = smul.addr %s211, 8
      %s213 = scalar_lea.vmem %s1, %s212
      %p214 = pneg %p62
      %p215 = pneg %p59
      %s216 = smul.u32 4, %s15
      %p217 = scmp.lt.s32.totalorder %s216, 7
      %s218 = scalar_select %p217, %s216, 7
      %s219 = smul.addr %s218, 2
      %s220 = scalar_lea.vmem %s2, %s219
      %p221 = pneg %p88
      %p222 = pneg %p85
      %s223 = smul.u32 4, %s15
      %p224 = scmp.lt.s32.totalorder %s223, 7
      %s225 = scalar_select %p224, %s223, 7
      %s226 = smul.addr %s225, 2
      %s227 = scalar_lea.vmem %s3, %s226
      %p228 = pneg %p114
      %p229 = pneg %p111
      %p230 = pneg %p140
      %p231 = pneg %p137
      %p232 = scmp.lt.s32.totalorder %s15, 1
      %s233 = scalar_select %p232, %s15, 1
      %s234 = smul.addr %s233, 8
      %s235 = scalar_lea.vmem %s4, %s234
      %s236 = smul.u32 4, %s15
      %p237 = scmp.lt.s32.totalorder %s236, 7
      %s238 = scalar_select %p237, %s236, 7
      %s239 = smul.addr %s238, 8
      %s240 = scalar_lea.vmem %s0, %s239
      %s241 = smul.u32 4, %s15
      %s242 = smul.u32 4, %s15
      %p243 = scmp.lt.s32.totalorder %s242, 7
      %s244 = scalar_select %p243, %s242, 7
      %s245 = smul.addr %s244, 8
      %s246 = scalar_lea.vmem %s1, %s245
      %s247 = smul.u32 4, %s15
      %s248 = smul.u32 4, %s15
      %p249 = scmp.lt.s32.totalorder %s248, 7
      %s250 = scalar_select %p249, %s248, 7
      %s251 = smul.addr %s250, 2
      %s252 = scalar_lea.vmem %s2, %s251
      %s253 = smul.u32 4, %s15
      %s254 = smul.u32 4, %s15
      %p255 = scmp.lt.s32.totalorder %s254, 7
      %s256 = scalar_select %p255, %s254, 7
      %s257 = smul.addr %s256, 2
      %s258 = scalar_lea.vmem %s3, %s257
      %s259 = smul.u32 4, %s15
      %p260 = scmp.lt.s32.totalorder %s15, 1
      %s261 = scalar_select %p260, %s15, 1
      %s262 = smul.addr %s261, 8
      %s263 = scalar_lea.vmem %s4, %s262
      %s264 = smul.u32 %s15, 32
      %v265 = vlaneseq
      %v266 = vshrl.u32 %v265, 7
      %v267 = vadd.s32 %v266, 8
      %v268 = vadd.s32 %v266, 16
      %v269 = vadd.s32 %v266, 24
      %v270 = vld [vmem:[%s240] sm:$0xff]
      %v271 = vld [vmem:[%s240 + $0x8] sm:$0xff]
      %v272 = vld [vmem:[%s240 + $0x10] sm:$0xff]
      %v273 = vld [vmem:[%s240 + $0x18] sm:$0xff]
      %v274 = vld [vmem:[%s246] sm:$0xff]
      %v275 = vld [vmem:[%s246 + $0x8] sm:$0xff]
      %v276 = vld [vmem:[%s246 + $0x10] sm:$0xff]
      %v277 = vld [vmem:[%s246 + $0x18] sm:$0xff]
      %v278 = vsub.f32 %v274, %v270
      %v279 = vsub.f32 %v275, %v271
      %v280 = vsub.f32 %v276, %v272
      %v281 = vsub.f32 %v277, %v273
      %v282 = vld [vmem:[%s252] sm:$0x3]
      %v283 = vld [vmem:[%s252 + $0x2] sm:$0x3]
      %v284 = vld [vmem:[%s252 + $0x4] sm:$0x3]
      %v285 = vld [vmem:[%s252 + $0x6] sm:$0x3]
      %v286 = vunpack.c.0.s8 %v282
      %v287 = vunpack.c.0.s8 %v283
      %v288 = vunpack.c.0.s8 %v284
      %v289 = vunpack.c.0.s8 %v285
      %v290 = vcvt.s32.f32 %v286
      %v291 = vcvt.s32.f32 %v287
      %v292 = vcvt.s32.f32 %v288
      %v293 = vcvt.s32.f32 %v289
      %v294 = vmul.f32 %v290, 0.8
      %v295 = vmul.f32 %v291, 0.8
      %v296 = vmul.f32 %v292, 0.8
      %v297 = vmul.f32 %v293, 0.8
      %v298 = vld [vmem:[%s258] sm:$0x3]
      %v299 = vld [vmem:[%s258 + $0x2] sm:$0x3]
      %v300 = vld [vmem:[%s258 + $0x4] sm:$0x3]
      %v301 = vld [vmem:[%s258 + $0x6] sm:$0x3]
      %v302 = vunpack.c.0.s8 %v298
      %v303 = vunpack.c.0.s8 %v299
      %v304 = vunpack.c.0.s8 %v300
      %v305 = vunpack.c.0.s8 %v301
      %v306 = vcvt.s32.f32 %v302
      %v307 = vcvt.s32.f32 %v303
      %v308 = vcvt.s32.f32 %v304
      %v309 = vcvt.s32.f32 %v305
      %v310 = vmul.f32 %v306, 0.2
      %v311 = vmul.f32 %v307, 0.2
      %v312 = vmul.f32 %v308, 0.2
      %v313 = vmul.f32 %v309, 0.2
      %v314 = vadd.f32 %v294, %v310
      %v315 = vadd.f32 %v295, %v311
      %v316 = vadd.f32 %v296, %v312
      %v317 = vadd.f32 %v297, %v313
      %v318 = vmul.f32 %v314, %v278
      %v319 = vmul.f32 %v315, %v279
      %v320 = vmul.f32 %v316, %v280
      %v321 = vmul.f32 %v317, %v281
      %v322 = vmul.f32 %v318, %v278
      %v323 = vmul.f32 %v319, %v279
      %v324 = vmul.f32 %v320, %v280
      %v325 = vmul.f32 %v321, %v281
      %s326 = sadd.s32 %s264, 0
      %v327 = vstv %s326
      %v328 = vadd.s32 %v327, %v266
      %v329 = vadd.s32 %v327, %v267
      %v330 = vadd.s32 %v327, %v268
      %v331 = vadd.s32 %v327, %v269
      %vm332 = vcmp.lt.s32.totalorder %v328, 64
      %vm333 = vcmp.lt.s32.totalorder %v329, 64
      %vm334 = vcmp.lt.s32.totalorder %v330, 64
      %vm335 = vcmp.lt.s32.totalorder %v331, 64
      %v336 = vsel %vm332, 1, 0
      %v337 = vsel %vm333, 1, 0
      %v338 = vsel %vm334, 1, 0
      %v339 = vsel %vm335, 1, 0
      %vm340 = vcmp.eq.s32.totalorder %v336, 1
      %vm341 = vcmp.eq.s32.totalorder %v337, 1
      %vm342 = vcmp.eq.s32.totalorder %v338, 1
      %vm343 = vcmp.eq.s32.totalorder %v339, 1
      %v344 = vsel %vm340, %v322, 0.0
      %v345 = vsel %vm341, %v323, 0.0
      %v346 = vsel %vm342, %v324, 0.0
      %v347 = vsel %vm343, %v325, 0.0
      %v348 = vadd.f32 %v344, %v345
      %v349 = vadd.f32 %v348, %v346
      %v350 = vadd.f32 %v349, %v347
      %v351 = vadd.f32 %v350, 0.0
      %352 = vst [vmem:[%s263] sm:$0xff] %v351
      %p353 = scmp.lt.s32.totalorder %s15, 1
      %s354 = scalar_select %p353, %s15, 1
      %s355 = smul.addr %s354, 8
      %s356 = scalar_lea.vmem %s4, %s355
      // Predicated region
      $region37: #{my_loss.1} parent=35 // pred_check
        %p357 = pneg %p137
      $region38: #{my_loss.1} parent=35 // pred_check_branch
        %359 = sbr.rel (%p357) target = $region40
      $region39: #{my_loss.1} parent=35 // pred_region
        _
      $region40: #{my_loss.1} parent=35 // pred_fallthru
        _
    $region36: #{my_loss.1} parent=5 // pred_fallthru
      _
    %p360 = scmp.le.s32.totalorder 2, %s10
    // Predicated region
    $region41: #{my_loss.1} parent=5 // pred_check
      %p361 = pneg %p360
    $region42: #{my_loss.1} parent=5 // pred_check_branch
      %363 = sbr.rel (%p361) target = $region44
    $region43: #{my_loss.1} parent=5 // pred_region
      %s364 = ssub.s32 %s10, 2
      // Predicated region
      $region45: #{my_loss.1} parent=43 // pred_check
        %p365 = pneg %p143
      $region46: #{my_loss.1} parent=43 // pred_check_branch
        %367 = sbr.rel (%p365) target = $region48
      $region47: #{my_loss.1} parent=43 // pred_region
        %p368 = scmp.lt.s32.totalorder %s16, 1
        %s369 = scalar_select %p368, %s16, 1
        %s370 = smul.addr %s369, 8
        %s371 = scalar_lea.vmem %s4, %s370
      $region48: #{my_loss.1} parent=43 // pred_fallthru
        _
    $region44: #{my_loss.1} parent=5 // pred_fallthru
      _
  $region6: #{my_loss.1} parent=0 // loop_footer
    %s14 = sadd.s32 1, %s10
  $region7: #{my_loss.1} parent=0 // loop_footer_branch
    %9 = sbr.rel target = $region3
  $region8: #{my_loss.1} parent=0 // loop_exit
    _

</llo_original>
